<compile_context>
chip_gen: v7x
topology: tpu7x:2x2x1
jax: 0.10.0
libtpu: 0.0.40
codegen_flags: <defaults>
</compile_context>

<pallas_src>
import functools

import jax
import jax.numpy as jnp
from jax.experimental import pallas as pl
from jax.experimental.pallas import tpu as pltpu


def _round_up(a, b):
    return -(-a // b) * b


def _focal_loss_kernel(x_ref, t_ref, *rest, gamma, ignore_index, has_weight):
    # x_ref: (TN, C) logits row tile, straight from the (N, C) HBM layout
    # t_ref: (1, TN) int32 targets (lane-dense; padded lanes = ignore_index)
    # w_ref: (C, 1)  float32 class weights (only present if has_weight)
    # o_ref: (1, TN) float32 masked focal values (0 where ignored / padded)
    if has_weight:
        w_ref, o_ref = rest
    else:
        w_ref = None
        (o_ref,) = rest

    # Class <-> lane swap in-kernel: classes on sublanes, samples on the
    # 128-wide lane axis, so every per-sample quantity is a lane-dense row.
    # XLU transpose; this kernel leaves the XLU idle so it hides under DMA.
    x = jnp.transpose(x_ref[...].astype(jnp.float32))          # (C, TN)
    t = t_ref[...]                                              # (1, TN)
    c, tn = x.shape

    valid = t != ignore_index                                   # (1, TN)
    t_safe = jnp.where(valid, t, 0)
    row = jax.lax.broadcasted_iota(jnp.int32, (c, tn), 0)
    onehot = (row == t_safe).astype(jnp.float32)                # (C, TN)

    # log_softmax over classes (sublane-axis reductions, cheap for small C)
    m = jnp.max(x, axis=0, keepdims=True)                       # (1, TN)
    z = x - m
    ez = jnp.exp(z)                                             # only big EUP op
    s = jnp.sum(ez, axis=0, keepdims=True)                      # (1, TN)
    z_t = jnp.sum(z * onehot, axis=0, keepdims=True)            # (1, TN)
    e_t = jnp.sum(ez * onehot, axis=0, keepdims=True)           # (1, TN)

    log_pt = z_t - jnp.log(s)                                   # (1, TN)
    pt = e_t / s                     # reuse exp(z): no second exp needed

    if has_weight:
        w = w_ref[...].astype(jnp.float32)                      # (C, 1)
        at = jnp.sum(w * onehot, axis=0, keepdims=True)         # (1, TN)
        log_pt = log_pt * at

    # pt may exceed 1 by a few ULPs; clamp so fractional gamma cannot NaN.
    # (Negative fractional gamma with pt == 1 still yields inf, as in torch.)
    one_m_pt = jnp.maximum(1.0 - pt, 0.0)

    g = float(gamma)
    if g >= 0.0 and g == int(g):
        mod = jnp.ones_like(one_m_pt)
        for _ in range(int(g)):                  # unrolled VPU multiply chain
            mod = mod * one_m_pt
    else:
        mod = jnp.power(one_m_pt, jnp.float32(g))

    focal = -1.0 * mod * log_pt                                 # (1, TN)
    o_ref[...] = jnp.where(valid, focal, 0.0)


def _pick_block_n(c, n, itemsize, block_n=None):
    """Lane-tile size from a pipelined-buffer VMEM model + generation info."""
    try:
        info = pltpu.get_tpu_info()
        vmem_cap = int(getattr(info, "vmem_capacity_bytes", 0)) or (64 << 20)
    except Exception:
        vmem_cap = 64 << 20                       # conservative (v7x) fallback

    sub = {4: 8, 2: 16, 1: 32}.get(int(itemsize), 8)
    c_in = _round_up(c, sub)                      # sublane-padded C (input dtype)
    c_f32 = _round_up(c, 8)                       # sublane-padded C (f32 temps)
    per_lane = (
        2 * c_in * itemsize                       # double-buffered logits tile
        + 2 * 8 * 4                               # 2x (1, bn) i32 targets (8-sublane pad)
        + 2 * 8 * 4                               # 2x (1, bn) f32 output   (8-sublane pad)
        + 4 * c_f32 * 4                           # x^T, exp(z), one-hot, products
    )
    budget = vmem_cap // 3

    if per_lane * 128 > budget:
        # TODO(synk): vocab-scale C needs a class-axis grid + online softmax.
        raise NotImplementedError(
            f"C={c} too large for a single-class-block focal-loss kernel "
            f"on this TPU's VMEM")

    if block_n is None:
        bn = (budget // per_lane) // 128 * 128
        bn = max(128, min(bn, 64 * 1024))
        if n > 256:
            # keep >= 2 grid steps so both v7x TensorCores get work
            bn = min(bn, max(128, _round_up(pl.cdiv(n, 2), 128)))
    else:
        bn = max(128, (int(block_n) // 128) * 128)
    return bn, per_lane, vmem_cap


def focal_loss(x, target, weight=None, gamma=2.0, reduction='mean',
               ignore_index=-100, block_n=None):
    """Pallas TPU FocalLoss forward.

    x:      (N, C) float logits (f32 or bf16; bf16 is not upcast in HBM)
    target: (N,)   int class indices (may contain ignore_index)
    weight: optional (C,) float per-class weights
    """
    x = jnp.asarray(x)
    n, c = x.shape

    if reduction not in ('mean', 'sum'):
        # TODO(synk): reduction='none' returns a boolean-filtered, dynamically
        # sized vector in the PyTorch module; no static-shape Pallas output.
        raise NotImplementedError("reduction='none' not supported in kernel")

    t_1d = jnp.asarray(target, jnp.int32)
    has_weight = weight is not None

    bn, per_lane, vmem_cap = _pick_block_n(c, n, x.dtype.itemsize, block_n)

    if n <= bn:
        # Single block covering the full arrays: always layout-legal, no padding.
        bn = n
        n_pad = n
        t2d = t_1d.reshape(1, n)
    else:
        # Tile samples; pad only the targets (cheap) with ignore_index.  The
        # ragged edge block reads OOB logits, but those lanes are masked.
        n_pad = _round_up(n, bn)
        t2d = jnp.pad(t_1d, (0, n_pad - n),
                      constant_values=ignore_index).reshape(1, n_pad)
    grid = (n_pad // bn,)

    need = bn * per_lane + _round_up(c, 8) * 128 * 4     # + resident weights
    vmem_limit = int(min(vmem_cap, max(2 * need, 32 << 20)))

    kernel = functools.partial(_focal_loss_kernel, gamma=float(gamma),
                               ignore_index=int(ignore_index),
                               has_weight=has_weight)

    in_specs = [
        pl.BlockSpec((bn, c), lambda i: (i, 0)),    # (N, C) row tiles, no wrapper transpose
        pl.BlockSpec((1, bn), lambda i: (0, i)),    # lane-dense targets
    ]
    operands = [x, t2d]
    if has_weight:
        in_specs.append(pl.BlockSpec((c, 1), lambda i: (0, 0)))
        operands.append(jnp.asarray(weight, jnp.float32).reshape(c, 1))

    focal = pl.pallas_call(
        kernel,
        out_shape=jax.ShapeDtypeStruct((1, n_pad), jnp.float32),
        grid_spec=pltpu.PrefetchScalarGridSpec(
            num_scalar_prefetch=0,
            grid=grid,
            in_specs=in_specs,
            out_specs=pl.BlockSpec((1, bn), lambda i: (0, i)),
        ),
        compiler_params=pltpu.CompilerParams(
            # every grid step writes a disjoint lane slice -> safe to shard
            # across v7x's two TensorCores; neutral on v5e/v6e.
            dimension_semantics=("parallel",),
            vmem_limit_bytes=vmem_limit,
        ),
    )(*operands)

    loss_sum = jnp.sum(focal)           # ignored / padded lanes are exact 0.0
    if reduction == 'sum':
        return loss_sum
    # 'mean': plain mean over non-ignored samples (matches the module's
    # focal_loss[not_ignored].mean(); NaN if every sample is ignored, like torch).
    cnt = jnp.sum((t_1d != ignore_index).astype(jnp.float32))
    return loss_sum / cnt


def _focal_loss_ref(x, target, weight, gamma, ignore_index):
    # pure-JAX reference mirroring the PyTorch module (reduction='mean')
    log_p = jax.nn.log_softmax(x, axis=1)
    p = jnp.exp(log_p)
    valid = target != ignore_index
    t_safe = jnp.where(valid, target, 0)
    log_pt = jnp.take_along_axis(log_p, t_safe[:, None], axis=1)[:, 0]
    pt = jnp.take_along_axis(p, t_safe[:, None], axis=1)[:, 0]
    if weight is not None:
        log_pt = log_pt * weight[t_safe]
    fl = -1.0 * (1.0 - pt) ** gamma * log_pt
    return jnp.sum(jnp.where(valid, fl, 0.0)) / jnp.sum(valid)


if __name__ == "__main__":
    key = jax.random.PRNGKey(0)
    kx, kt, kw, kx2, kt2 = jax.random.split(key, 5)

    # Case 1: small single-block path, weighted, reduction='mean'
    N, C = 64, 10
    x = jax.random.normal(kx, (N, C), jnp.float32)
    target = jax.random.randint(kt, (N,), 0, C, jnp.int32)
    target = target.at[3].set(-100).at[17].set(-100)   # some ignored samples
    weight = 0.5 + jax.random.uniform(kw, (C,), jnp.float32)

    loss = jax.block_until_ready(
        focal_loss(x, target, weight=weight, gamma=2.0,
                   reduction='mean', ignore_index=-100))
    ref = _focal_loss_ref(x, target, weight, 2.0, -100)
    assert jnp.allclose(loss, ref, rtol=1e-5, atol=1e-5), (loss, ref)

    # reduction='sum', unweighted path (no weight operand / BlockSpec at all)
    loss_s = jax.block_until_ready(
        focal_loss(x, target, weight=None, gamma=2.0,
                   reduction='sum', ignore_index=-100))
    ref_s = _focal_loss_ref(x, target, None, 2.0, -100) * jnp.sum(target != -100)
    assert jnp.allclose(loss_s, ref_s, rtol=1e-5, atol=1e-5), (loss_s, ref_s)

    # Case 2: multi-block path with a ragged edge block (N % block_n != 0):
    # exercises padded targets + partially out-of-bounds logits tile.
    N2, C2 = 1000, 7
    x2 = jax.random.normal(kx2, (N2, C2), jnp.float32)
    t2 = jax.random.randint(kt2, (N2,), 0, C2, jnp.int32)
    t2 = t2.at[0].set(-100).at[999].set(-100)
    loss2 = jax.block_until_ready(
        focal_loss(x2, t2, weight=None, gamma=2.0,
                   reduction='mean', ignore_index=-100, block_n=256))
    ref2 = _focal_loss_ref(x2, t2, None, 2.0, -100)
    assert jnp.allclose(loss2, ref2, rtol=1e-5, atol=1e-5), (loss2, ref2)

    print("KERNEL_OK")
</pallas_src>

<mosaic_0001>
module attributes {stable_mosaic.version = 11 : i64} {
  func.func @_focal_loss_kernel(%arg0: i32, %arg1: memref<64x10xf32, #tpu.memory_space<vmem>>, %arg2: memref<1x64xi32, #tpu.memory_space<vmem>>, %arg3: memref<10x1xf32, #tpu.memory_space<vmem>>, %arg4: memref<1x64xf32, #tpu.memory_space<vmem>>) attributes {dimension_semantics = [#tpu.dimension_semantics<parallel>], iteration_bounds = array<i64: 1>, scalar_prefetch = 0 : i64, scratch_operands = 0 : i64, tpu.core_type = #tpu.core_type<tc>, window_params = [{transform_indices = @transform_0, window_bounds = array<i64: 64, 10>}, {transform_indices = @transform_1, window_bounds = array<i64: 1, 64>}, {pipeline_mode = #tpu.pipeline_mode<synchronous>, transform_indices = @transform_2, window_bounds = array<i64: 10, 1>}, {transform_indices = @transform_3, window_bounds = array<i64: 1, 64>}]} {
    %c0 = arith.constant 0 : index
    %c0_0 = arith.constant 0 : index
    %0 = vector.load %arg1[%c0, %c0_0] : memref<64x10xf32, #tpu.memory_space<vmem>>, vector<64x10xf32>
    %1 = tpu.transpose %0, [1, 0] : vector<64x10xf32> -> vector<10x64xf32>
    %c0_1 = arith.constant 0 : index
    %c0_2 = arith.constant 0 : index
    %2 = vector.load %arg2[%c0_1, %c0_2] : memref<1x64xi32, #tpu.memory_space<vmem>>, vector<1x64xi32>
    %c-100_i32 = arith.constant -100 : i32
    %3 = vector.broadcast %c-100_i32 : i32 to vector<1x64xi32>
    %4 = arith.cmpi ne, %2, %3 : vector<1x64xi32>
    %c0_i32 = arith.constant 0 : i32
    %5 = vector.broadcast %c0_i32 : i32 to vector<1x64xi32>
    %6 = arith.select %4, %2, %5 : vector<1x64xi1>, vector<1x64xi32>
    %7 = tpu.iota {dimensions = array<i32: 0>} : vector<10x64xi32>
    %8 = vector.broadcast %6 : vector<1x64xi32> to vector<10x64xi32>
    %9 = arith.cmpi eq, %7, %8 : vector<10x64xi32>
    %10 = arith.extui %9 : vector<10x64xi1> to vector<10x64xi32>
    %11 = arith.sitofp %10 : vector<10x64xi32> to vector<10x64xf32>
    %cst = arith.constant dense<0xFF800000> : vector<64xf32>
    %12 = vector.multi_reduction <maximumf>, %1, %cst [0] : vector<10x64xf32> to vector<64xf32>
    %13 = vector.shape_cast %12 : vector<64xf32> to vector<1x64xf32>
    %14 = vector.broadcast %13 : vector<1x64xf32> to vector<10x64xf32>
    %15 = arith.subf %1, %14 : vector<10x64xf32>
    %16 = math.exp %15 : vector<10x64xf32>
    %cst_3 = arith.constant dense<0.000000e+00> : vector<64xf32>
    %17 = vector.multi_reduction <add>, %16, %cst_3 [0] : vector<10x64xf32> to vector<64xf32>
    %18 = vector.shape_cast %17 : vector<64xf32> to vector<1x64xf32>
    %19 = arith.mulf %15, %11 : vector<10x64xf32>
    %cst_4 = arith.constant dense<0.000000e+00> : vector<64xf32>
    %20 = vector.multi_reduction <add>, %19, %cst_4 [0] : vector<10x64xf32> to vector<64xf32>
    %21 = vector.shape_cast %20 : vector<64xf32> to vector<1x64xf32>
    %22 = arith.mulf %16, %11 : vector<10x64xf32>
    %cst_5 = arith.constant dense<0.000000e+00> : vector<64xf32>
    %23 = vector.multi_reduction <add>, %22, %cst_5 [0] : vector<10x64xf32> to vector<64xf32>
    %24 = vector.shape_cast %23 : vector<64xf32> to vector<1x64xf32>
    %25 = math.log %18 : vector<1x64xf32>
    %26 = arith.subf %21, %25 : vector<1x64xf32>
    %27 = arith.divf %24, %18 : vector<1x64xf32>
    %c0_6 = arith.constant 0 : index
    %c0_7 = arith.constant 0 : index
    %28 = vector.load %arg3[%c0_6, %c0_7] : memref<10x1xf32, #tpu.memory_space<vmem>>, vector<10x1xf32>
    %29 = vector.broadcast %28 : vector<10x1xf32> to vector<10x64xf32>
    %30 = arith.mulf %29, %11 : vector<10x64xf32>
    %cst_8 = arith.constant dense<0.000000e+00> : vector<64xf32>
    %31 = vector.multi_reduction <add>, %30, %cst_8 [0] : vector<10x64xf32> to vector<64xf32>
    %32 = vector.shape_cast %31 : vector<64xf32> to vector<1x64xf32>
    %33 = arith.mulf %26, %32 : vector<1x64xf32>
    %cst_9 = arith.constant 1.000000e+00 : f32
    %34 = vector.broadcast %cst_9 : f32 to vector<1x64xf32>
    %35 = arith.subf %34, %27 : vector<1x64xf32>
    %cst_10 = arith.constant 0.000000e+00 : f32
    %36 = vector.broadcast %cst_10 : f32 to vector<1x64xf32>
    %37 = arith.maximumf %35, %36 : vector<1x64xf32>
    %cst_11 = arith.constant 1.000000e+00 : f32
    %38 = vector.broadcast %cst_11 : f32 to vector<1x64xf32>
    %39 = arith.mulf %38, %37 : vector<1x64xf32>
    %40 = arith.mulf %39, %37 : vector<1x64xf32>
    %cst_12 = arith.constant -1.000000e+00 : f32
    %41 = vector.broadcast %cst_12 : f32 to vector<1x64xf32>
    %42 = arith.mulf %41, %40 : vector<1x64xf32>
    %43 = arith.mulf %42, %33 : vector<1x64xf32>
    %cst_13 = arith.constant 0.000000e+00 : f32
    %44 = vector.broadcast %cst_13 : f32 to vector<1x64xf32>
    %45 = arith.select %4, %43, %44 : vector<1x64xi1>, vector<1x64xf32>
    %c0_14 = arith.constant 0 : index
    %c0_15 = arith.constant 0 : index
    %46 = vector.load %arg4[%c0_14, %c0_15] : memref<1x64xf32, #tpu.memory_space<vmem>>, vector<1x64xf32>
    tpu.vector_store %arg4[%c0_14, %c0_15], %45 {strides = array<i32>} : memref<1x64xf32, #tpu.memory_space<vmem>>, vector<1x64xf32>,
    return
  }
  func.func @transform_0(%arg0: i32) -> (i32, i32) {
    %c0_i32 = arith.constant 0 : i32
    %c0_i32_0 = arith.constant 0 : i32
    return %arg0, %c0_i32 : i32, i32
  }
  func.func @transform_1(%arg0: i32) -> (i32, i32) {
    %c0_i32 = arith.constant 0 : i32
    %c0_i32_0 = arith.constant 0 : i32
    return %c0_i32, %arg0 : i32, i32
  }
  func.func @transform_2(%arg0: i32) -> (i32, i32) {
    %c0_i32 = arith.constant 0 : i32
    %c0_i32_0 = arith.constant 0 : i32
    %c0_i32_1 = arith.constant 0 : i32
    return %c0_i32, %c0_i32_0 : i32, i32
  }
  func.func @transform_3(%arg0: i32) -> (i32, i32) {
    %c0_i32 = arith.constant 0 : i32
    %c0_i32_0 = arith.constant 0 : i32
    return %c0_i32, %arg0 : i32, i32
  }
}

</mosaic_0001>

<llo_original>
// kernel: tpu_custom_call.1
$region0: #{tpu_custom_call.1}
  #allocation0 [shape = 'u32[]', space=smem, size = 0x4, offset = 0x4, fixed_abs, tag = 'smem constant byte address 0x4 - core index']
  #allocation1 [shape = 'u32[144,128]{1,0:T(1,128)}', space=vmem, size = 0x12000, scoped, tag = 'internal scratch']
  %s0 = inlined_call_operand.vmem [shape: f32[64,10], index: 0, kind: input, shape index: {}]
  %s1 = inlined_call_operand.vmem [shape: s32[1,64], index: 1, kind: input, shape index: {}]
  %s2 = inlined_call_operand.vmem [shape: f32[10,1], index: 2, kind: input, shape index: {}]
  %s3 = inlined_call_operand.hbm [shape: f32[1,64], index: 3, kind: output, shape index: {}]
  %s4 = sld [smem:[#allocation0]]
  $region22: #{tpu_custom_call.1} parent=0
    _
  %s6 = ssub.s32 1, %s4
  %s7 = scalar_select 0, %s6, %s4
  $region1: #{tpu_custom_call.1} parent=0
    #allocation2 [shape = 'u8[512]{0}', space=vmem, size = 0x400, scoped, tag = 'output window, operand 0, single buffered']
    #allocation3 [shape = 's32[1]{0}', space=sflag, size = 0x4, scoped, tag = 'scoped memory for tpu_custom_call.1']
    %8 = vsyncpa [#allocation3], 0
    // Predicated region
    $region2: #{tpu_custom_call.1} parent=1 // pred_check
      _
    $region3: #{tpu_custom_call.1} parent=1 // pred_check_branch
      %10 = sbr.rel (0) target = $region5
    $region4: #{tpu_custom_call.1} parent=1 // pred_region
      _
    $region5: #{tpu_custom_call.1} parent=1 // pred_fallthru
      _
    // Predicated region
    $region6: #{tpu_custom_call.1} parent=1 // pred_check
      _
    $region7: #{tpu_custom_call.1} parent=1 // pred_check_branch
      %12 = sbr.rel (0) target = $region9
    $region8: #{tpu_custom_call.1} parent=1 // pred_region
      _
    $region9: #{tpu_custom_call.1} parent=1 // pred_fallthru
      _
    // Predicated region
    $region10: #{tpu_custom_call.1} parent=1 // pred_check
      _
    $region11: #{tpu_custom_call.1} parent=1 // pred_check_branch
      %14 = sbr.rel (0) target = $region13
    $region12: #{tpu_custom_call.1} parent=1 // pred_region
      _
    $region13: #{tpu_custom_call.1} parent=1 // pred_fallthru
      _
    %v15 = vld [vmem:[%s0] sm:$0xff]
    %v16 = vld [vmem:[%s0 + $0x8] sm:$0xff]
    %v17 = vld [vmem:[%s0 + $0x10] sm:$0xff]
    %v18 = vld [vmem:[%s0 + $0x18] sm:$0xff]
    %v19 = vld [vmem:[%s0 + $0x20] sm:$0xff]
    %v20 = vld [vmem:[%s0 + $0x28] sm:$0xff]
    %v21 = vld [vmem:[%s0 + $0x30] sm:$0xff]
    %v22 = vld [vmem:[%s0 + $0x38] sm:$0xff]
    %23 = vxpose.xlu0.b32.start [1/16] %v15, 128
    %24 = vxpose.xlu0.b32.cont [2/16] %v16, 128
    %25 = vxpose.xlu0.b32.cont [3/16] %v17, 128
    %26 = vxpose.xlu0.b32.cont [4/16] %v18, 128
    %27 = vxpose.xlu0.b32.cont [5/16] %v19, 128
    %28 = vxpose.xlu0.b32.cont [6/16] %v20, 128
    %29 = vxpose.xlu0.b32.cont [7/16] %v21, 128
    %30 = vxpose.xlu0.b32.cont [8/16] %v22, 128
    %31 = vxpose.xlu0.b32.cont [9/16] 0.0, 128
    %32 = vxpose.xlu0.b32.cont [10/16] 0.0, 128
    %33 = vxpose.xlu0.b32.cont [11/16] 0.0, 128
    %34 = vxpose.xlu0.b32.cont [12/16] 0.0, 128
    %35 = vxpose.xlu0.b32.cont [13/16] 0.0, 128
    %36 = vxpose.xlu0.b32.cont [14/16] 0.0, 128
    %37 = vxpose.xlu0.b32.cont [15/16] 0.0, 128
    %38 = vxpose.xlu0.b32.end [16/16] 0.0, 128
    %v39 = vpop.trf.xlu0
    %v40 = vpop.trf.xlu0
    %v41 = vpop.trf.xlu0
    %v42 = vpop.trf.xlu0
    %v43 = vpop.trf.xlu0
    %v44 = vpop.trf.xlu0
    %v45 = vpop.trf.xlu0
    %v46 = vpop.trf.xlu0
    %v47 = vpop.trf.xlu0
    %v48 = vpop.trf.xlu0
    %v49 = vpop.trf.xlu0
    %v50 = vpop.trf.xlu0
    %v51 = vpop.trf.xlu0
    %v52 = vpop.trf.xlu0
    %v53 = vpop.trf.xlu0
    %v54 = vpop.trf.xlu0
    %v55 = vld [vmem:[%s1] sm:$0x1]
    %vm56 = vcmp.ne.s32.totalorder %v55, 4294967196
    %v57 = vsel %vm56, %v55, 0
    %v58 = vlaneseq
    %v59 = vshrl.u32 %v58, 7
    %v60 = vadd.s32 %v59, 8
    %v61 = vlaneseq
    %v62 = vshrl.u32 %v61, 7
    %v63 = vsub.s32 0, %v62
    %v64 = vrot.slane %v57, %v63
    %vm65 = vcmp.eq.s32.totalorder %v59, %v64
    %vm66 = vcmp.eq.s32.totalorder %v60, %v64
    %v67 = vsel %vm65, 1, 0
    %v68 = vsel %vm66, 1, 0
    %v69 = vcvt.s32.f32 %v67
    %v70 = vcvt.s32.f32 %v68
    %vm71 = vcmask 523264
    %v72 = vsel %vm71, %v39, -inf
    %vm73 = vcmask 517120
    %v74 = vsel %vm73, %v40, -inf
    %v75 = vmax.f32 %v72, %v74
    %v76 = vrot.slane %v75, 4
    %v77 = vmax.f32 %v75, %v76
    %v78 = vrot.slane %v77, 2
    %v79 = vmax.f32 %v77, %v78
    %v80 = vrot.slane %v79, 1
    %v81 = vmax.f32 %v79, %v80
    %v82 = vsub.f32 %v39, %v81
    %v83 = vsub.f32 %v40, %v81
    %v84 = vmul.f32 %v82, 1.442695
    %v85 = vpow.pop %v84
    %v86 = vmul.f32 %v83, 1.442695
    %v87 = vpow.pop %v86
    %v88 = vsel %vm71, %v85, 0.0
    %v89 = vsel %vm73, %v87, 0.0
    %v90 = vadd.f32 %v88, %v89
    %v91 = vrot.slane %v90, 4
    %v92 = vadd.f32 %v90, %v91
    %v93 = vrot.slane %v92, 2
    %v94 = vadd.f32 %v92, %v93
    %v95 = vrot.slane %v94, 1
    %v96 = vadd.f32 %v94, %v95
    %v97 = vmul.f32 %v82, %v69
    %v98 = vmul.f32 %v83, %v70
    %v99 = vsel %vm71, %v97, 0.0
    %v100 = vsel %vm73, %v98, 0.0
    %v101 = vadd.f32 %v99, %v100
    %v102 = vrot.slane %v101, 4
    %v103 = vadd.f32 %v101, %v102
    %v104 = vrot.slane %v103, 2
    %v105 = vadd.f32 %v103, %v104
    %v106 = vrot.slane %v105, 1
    %v107 = vadd.f32 %v105, %v106
    %v108 = vmul.f32 %v85, %v69
    %v109 = vmul.f32 %v87, %v70
    %v110 = vsel %vm71, %v108, 0.0
    %v111 = vsel %vm73, %v109, 0.0
    %v112 = vadd.f32 %v110, %v111
    %v113 = vrot.slane %v112, 4
    %v114 = vadd.f32 %v112, %v113
    %v115 = vrot.slane %v114, 2
    %v116 = vadd.f32 %v114, %v115
    %v117 = vrot.slane %v116, 1
    %v118 = vadd.f32 %v116, %v117
    %v119 = vlog2.pop %v96
    %v120 = vmul.f32 %v119, 0.6931472
    %v121 = vsub.f32 %v107, %v120
    %v122 = vrcp.pop %v96
    %v123 = vmul.f32 %v118, %v122
    %v124 = vld [vmem:[%s2] sm:$0xff]
    %v125 = vld [vmem:[%s2 + $0x8] sm:$0x3]
    %127 = vset.pattern.permute.xlu0 0
    %128 = vperm.xlu0 %127, %v124
    %v129 = vpop.permute.xlu0 %128
    %132 = vset.pattern.permute.xlu0 0
    %133 = vperm.xlu0 %132, %v125
    %v134 = vpop.permute.xlu0 %133
    %v136 = vmul.f32 %v129, %v69
    %v137 = vmul.f32 %v134, %v70
    %v138 = vsel %vm71, %v136, 0.0
    %v139 = vsel %vm73, %v137, 0.0
    %v140 = vadd.f32 %v138, %v139
    %v141 = vrot.slane %v140, 4
    %v142 = vadd.f32 %v140, %v141
    %v143 = vrot.slane %v142, 2
    %v144 = vadd.f32 %v142, %v143
    %v145 = vrot.slane %v144, 1
    %v146 = vadd.f32 %v144, %v145
    %v147 = vmul.f32 %v121, %v146
    %v148 = vsub.f32 1.0, %v123
    %v149 = vmax.f32 %v148, 0.0
    %v150 = vmul.f32 %v149, %v149
    %v151 = vmul.f32 %v150, -1.0
    %v152 = vmul.f32 %v151, %v147
    %v153 = vsel %vm56, %v152, 0.0
    %vm154 = vcmask 516096
    %155 = vst.msk [vmem:[#allocation2] sm:$0x1] %vm154, %v153
    // Predicated region
    $region14: #{tpu_custom_call.1} parent=1 // pred_check
      _
    $region15: #{tpu_custom_call.1} parent=1 // pred_check_branch
      %157 = sbr.rel (0) target = $region17
    $region16: #{tpu_custom_call.1} parent=1 // pred_region
      %s159 = ssub.s32 16, 16
      %160 = vsyncadd [#allocation3], %s159
      %s162 = sshll.u32 [#allocation2], 4
      %s163 = int_to_ptr.vmem [resolvable:$true] %s162
      %165 = dma.vmem_to_hbm [thread:$0]  %s163, 16, %s3, [#allocation3]
    $region17: #{tpu_custom_call.1} parent=1 // pred_fallthru
      _
    // Predicated region
    $region18: #{tpu_custom_call.1} parent=1 // pred_check
      _
    $region19: #{tpu_custom_call.1} parent=1 // pred_check_branch
      %167 = sbr.rel (0) target = $region21
    $region20: #{tpu_custom_call.1} parent=1 // pred_region
      %168 = dma.done [#allocation3], 16
    $region21: #{tpu_custom_call.1} parent=1 // pred_fallthru
      _
    %169 = vsyncpa [#allocation3], 1

</llo_original>
